<compile_context>
chip_gen: v7x
topology: tpu7x:2x2x1
jax: 0.10.0
libtpu: 0.0.40
codegen_flags: <defaults>
</compile_context>

<pallas_src>
from functools import partial

import jax
import jax.numpy as jnp
from jax.experimental import pallas as pl
from jax.experimental.pallas import tpu as pltpu


# ----------------------------- fused Pallas kernel -----------------------------

def _fused_mlp_kernel(s_ref, a_ref, w_ref, v_ref, o_ref, *, eps):
    """Whole forward pass in one kernel; activations never leave VMEM/vregs.

    s_ref : (B, state_dim)   state block
    a_ref : (B, action_dim)  action block
    w_ref : (L+2, h, h)      stacked weights:
                               [0]    input Linear  (rows >= in_dim are zero)
                               [1..L] hidden Linears
                               [L+1]  output Linear (cols >= out_size are zero)
    v_ref : (2+3L, h)        stacked vectors:
                               row 0             b_in
                               rows 1+3l..3+3l   bias_l, gamma_l, beta_l
                               row 1+3L          b_out (cols >= out_size are zero)
    o_ref : (B, h)           output block (lane-padded to h; wrapper slices to out_size)
    """
    num_layers = w_ref.shape[0] - 2
    state_dim = s_ref.shape[-1]
    action_dim = a_ref.shape[-1]

    vecs = v_ref[...]                      # (2+3L, h): one small resident tile

    def row(r):                            # (1, h) row; broadcasts on use
        return vecs[r:r + 1, :]

    # --- input Linear + tanh --------------------------------------------------
    # torch.cat((state, action), -1) @ W_in computed as two partial dots, which
    # folds the concat into the kernel with no in-kernel concatenate needed.
    w0 = w_ref[0]                          # (h, h)
    y = (jnp.dot(s_ref[...], w0[:state_dim, :],
                 preferred_element_type=jnp.float32)
         + jnp.dot(a_ref[...], w0[state_dim:state_dim + action_dim, :],
                   preferred_element_type=jnp.float32)
         + row(0))
    h = jnp.tanh(y)

    # --- L x [Linear -> LayerNorm -> tanh], statically unrolled (L is tiny) ---
    # TODO(synk): switch to lax.fori_loop if num_layers ever grows beyond a handful.
    for l in range(num_layers):
        y = jnp.dot(h, w_ref[l + 1], preferred_element_type=jnp.float32) + row(1 + 3 * l)
        mean = jnp.mean(y, axis=-1, keepdims=True)         # XLU reduction
        cent = y - mean
        var = jnp.mean(cent * cent, axis=-1, keepdims=True)
        y = cent * jax.lax.rsqrt(var + eps)                 # EUP rsqrt
        y = y * row(2 + 3 * l) + row(3 + 3 * l)
        h = jnp.tanh(y)                                     # EUP tanh

    # --- output Linear (cols zero-padded out_size -> h; wrapper slices) -------
    out = jnp.dot(h, w_ref[num_layers + 1],
                  preferred_element_type=jnp.float32) + row(1 + 3 * num_layers)
    o_ref[...] = out.astype(o_ref.dtype)


# ----------------------------- wrapper -----------------------------------------

def nn_forward(params, state, action, *, eps=1e-5, batch_block=128):
    """Forward pass of the NN module. Returns (B, out_size)."""
    w_stack = params["w_stack"]            # (L+2, h, h) f32
    vecs = params["vecs"]                  # (2+3L, h)  f32
    out_size = params["out_size"]          # python int
    h = w_stack.shape[-1]

    state = state.astype(jnp.float32)
    action = action.astype(jnp.float32)
    B = state.shape[0]

    kernel = partial(_fused_mlp_kernel, eps=eps)

    if B <= batch_block:
        # Tiny batch: single invocation, every operand a full-extent VMEM block.
        # (No grid -> no pipelining machinery; kernel is launch-overhead bound.)
        vmem = pl.BlockSpec(memory_space=pltpu.MemorySpace.VMEM)
        out_pad = pl.pallas_call(
            kernel,
            out_shape=jax.ShapeDtypeStruct((B, h), jnp.float32),
            in_specs=[vmem, vmem, vmem, vmem],
            out_specs=vmem,
        )(state, action, w_stack, vecs)
    else:
        # Large batch: grid over B.  Weight/vector index_maps are constant, so the
        # packed weights stay resident in VMEM across the whole grid; "parallel"
        # lets batch tiles shard across v7x's two TensorCores (no-op on v5e/v6e).
        n_blk = pl.cdiv(B, batch_block)
        Bp = n_blk * batch_block
        if Bp != B:
            state = jnp.pad(state, ((0, Bp - B), (0, 0)))
            action = jnp.pad(action, ((0, Bp - B), (0, 0)))
        out_pad = pl.pallas_call(
            kernel,
            out_shape=jax.ShapeDtypeStruct((Bp, h), jnp.float32),
            grid=(n_blk,),
            in_specs=[
                pl.BlockSpec((batch_block, state.shape[-1]), lambda i: (i, 0)),
                pl.BlockSpec((batch_block, action.shape[-1]), lambda i: (i, 0)),
                pl.BlockSpec(w_stack.shape, lambda i: (0, 0, 0)),
                pl.BlockSpec(vecs.shape, lambda i: (0, 0)),
            ],
            out_specs=pl.BlockSpec((batch_block, h), lambda i: (i, 0)),
            compiler_params=pltpu.CompilerParams(
                dimension_semantics=("parallel",)),
        )(state, action, w_stack, vecs)
        out_pad = out_pad[:B]

    # w_out / b_out columns beyond out_size are zero padding -> slice them off.
    return out_pad[:, :out_size]


# ----------------------------- params ------------------------------------------

def init_params(key, state_dim, action_dim, hidden, num_layers, out_size):
    """Deterministic synthetic init; packs weights for the fused kernel.

    Packing (logical shapes match the PyTorch module):
      w_stack : (L+2, h, h)  [w_in (rows padded to h), w_h_0..w_h_{L-1}, w_out (cols padded)]
      vecs    : (2+3L, h)    [b_in, (bias, gamma, beta) x L, b_out (cols padded)]
    """
    in_dim = state_dim + action_dim
    assert in_dim <= hidden and out_size <= hidden, \
        "packed layout assumes in_dim <= hidden and out_size <= hidden"

    def dense(k, din, dout):
        k, kw, kb = jax.random.split(k, 3)
        bound = 1.0 / jnp.sqrt(din)
        w = jax.random.uniform(kw, (din, dout), jnp.float32, -bound, bound)
        b = jax.random.uniform(kb, (dout,), jnp.float32, -bound, bound)
        return k, w, b

    k = key
    h = hidden
    w_stack, vec_rows = [], []

    # input layer (in_dim, h) -> rows zero-padded to h
    k, w_in, b_in = dense(k, in_dim, h)
    w_stack.append(jnp.zeros((h, h), jnp.float32).at[:in_dim, :].set(w_in))
    vec_rows.append(b_in)

    # hidden layers: Linear + LayerNorm params
    for _ in range(num_layers):
        k, w, b = dense(k, h, h)
        w_stack.append(w)
        vec_rows.extend([b, jnp.ones((h,), jnp.float32), jnp.zeros((h,), jnp.float32)])

    # output layer (h, out_size) -> cols zero-padded to h
    k, w_out, b_out = dense(k, h, out_size)
    w_stack.append(jnp.zeros((h, h), jnp.float32).at[:, :out_size].set(w_out))
    vec_rows.append(jnp.zeros((h,), jnp.float32).at[:out_size].set(b_out))

    return {
        "w_stack": jnp.stack(w_stack, axis=0),   # (L+2, h, h)
        "vecs": jnp.stack(vec_rows, axis=0),     # (2+3L, h)
        "out_size": out_size,
    }


# ----------------------------- pure-JAX reference -------------------------------

def ref_forward(params, state, action, *, eps=1e-5):
    w, v = params["w_stack"], params["vecs"]
    L = w.shape[0] - 2
    in_dim = state.shape[-1] + action.shape[-1]
    x = jnp.concatenate([state, action], axis=-1)
    x = jnp.tanh(x @ w[0][:in_dim, :] + v[0])
    for l in range(L):
        y = x @ w[l + 1] + v[1 + 3 * l]
        mu = jnp.mean(y, -1, keepdims=True)
        var = jnp.mean((y - mu) ** 2, -1, keepdims=True)
        y = (y - mu) * jax.lax.rsqrt(var + eps) * v[2 + 3 * l] + v[3 + 3 * l]
        x = jnp.tanh(y)
    out = x @ w[L + 1] + v[1 + 3 * L]
    return out[:, :params["out_size"]]


# ----------------------------- main ---------------------------------------------

if __name__ == "__main__":
    # small shapes implied by the module's forward pass
    batch = 2
    state_dim = 8
    action_dim = 4
    hidden = 32          # args.fdi_hidden_size
    num_layers = 2       # args.fdi_num_layers
    out_size = 8         # args.fdi_out_size

    key = jax.random.PRNGKey(0)
    kp, ks, ka, ksb, kab = jax.random.split(key, 5)

    params = init_params(kp, state_dim, action_dim, hidden, num_layers, out_size)

    # --- small-batch path (no grid) ---
    state = jax.random.normal(ks, (batch, state_dim), jnp.float32)
    action = jax.random.normal(ka, (batch, action_dim), jnp.float32)
    out = nn_forward(params, state, action)
    jax.block_until_ready(out)
    ref = ref_forward(params, state, action)
    assert out.shape == (batch, out_size)
    assert jnp.allclose(out, ref, atol=1e-4, rtol=1e-4)

    # --- large-batch path (B-grid, parallel tiles, padding exercised) ---
    big = 261
    state_b = jax.random.normal(ksb, (big, state_dim), jnp.float32)
    action_b = jax.random.normal(kab, (big, action_dim), jnp.float32)
    out_b = nn_forward(params, state_b, action_b)
    jax.block_until_ready(out_b)
    ref_b = ref_forward(params, state_b, action_b)
    assert out_b.shape == (big, out_size)
    assert jnp.allclose(out_b, ref_b, atol=1e-4, rtol=1e-4)

    print("KERNEL_OK")
</pallas_src>

<mosaic_0001>
module attributes {stable_mosaic.version = 11 : i64} {
  func.func @_fused_mlp_kernel(%arg0: memref<2x8xf32, #tpu.memory_space<vmem>>, %arg1: memref<2x4xf32, #tpu.memory_space<vmem>>, %arg2: memref<4x32x32xf32, #tpu.memory_space<vmem>>, %arg3: memref<8x32xf32, #tpu.memory_space<vmem>>, %arg4: memref<2x32xf32, #tpu.memory_space<vmem>>) attributes {dimension_semantics = [], scalar_prefetch = 0 : i64, scratch_operands = 0 : i64, tpu.core_type = #tpu.core_type<tc>} {
    %c0 = arith.constant 0 : index
    %c0_0 = arith.constant 0 : index
    %0 = vector.load %arg3[%c0, %c0_0] : memref<8x32xf32, #tpu.memory_space<vmem>>, vector<8x32xf32>
    %c0_1 = arith.constant 0 : index
    %c0_2 = arith.constant 0 : index
    %c0_3 = arith.constant 0 : index
    %1 = vector.load %arg2[%c0_1, %c0_2, %c0_3] : memref<4x32x32xf32, #tpu.memory_space<vmem>>, vector<1x32x32xf32>
    %2 = vector.shape_cast %1 : vector<1x32x32xf32> to vector<32x32xf32>
    %c0_4 = arith.constant 0 : index
    %c0_5 = arith.constant 0 : index
    %3 = vector.load %arg0[%c0_4, %c0_5] : memref<2x8xf32, #tpu.memory_space<vmem>>, vector<2x8xf32>
    %4 = vector.extract_strided_slice %2 {offsets = [0, 0], sizes = [8, 32], strides = [1, 1]} : vector<32x32xf32> to vector<8x32xf32>
    %cst = arith.constant dense<0.000000e+00> : vector<2x32xf32>
    %5 = tpu.matmul %3, %4, %cst {dimension_numbers = #tpu.dot_dimension_numbers<[1], [0], [0], [1], [0, 0, 1, 1], [], []>} : vector<2x8xf32>, vector<8x32xf32>, vector<2x32xf32> -> vector<2x32xf32>
    %c0_6 = arith.constant 0 : index
    %c0_7 = arith.constant 0 : index
    %6 = vector.load %arg1[%c0_6, %c0_7] : memref<2x4xf32, #tpu.memory_space<vmem>>, vector<2x4xf32>
    %7 = vector.extract_strided_slice %2 {offsets = [8, 0], sizes = [4, 32], strides = [1, 1]} : vector<32x32xf32> to vector<4x32xf32>
    %cst_8 = arith.constant dense<0.000000e+00> : vector<2x32xf32>
    %8 = tpu.matmul %6, %7, %cst_8 {dimension_numbers = #tpu.dot_dimension_numbers<[1], [0], [0], [1], [0, 0, 1, 1], [], []>} : vector<2x4xf32>, vector<4x32xf32>, vector<2x32xf32> -> vector<2x32xf32>
    %9 = arith.addf %5, %8 : vector<2x32xf32>
    %10 = vector.extract_strided_slice %0 {offsets = [0, 0], sizes = [1, 32], strides = [1, 1]} : vector<8x32xf32> to vector<1x32xf32>
    %11 = vector.broadcast %10 : vector<1x32xf32> to vector<2x32xf32>
    %12 = arith.addf %9, %11 : vector<2x32xf32>
    %13 = math.tanh %12 : vector<2x32xf32>
    %c1 = arith.constant 1 : index
    %c0_9 = arith.constant 0 : index
    %c0_10 = arith.constant 0 : index
    %14 = vector.load %arg2[%c1, %c0_9, %c0_10] : memref<4x32x32xf32, #tpu.memory_space<vmem>>, vector<1x32x32xf32>
    %15 = vector.shape_cast %14 : vector<1x32x32xf32> to vector<32x32xf32>
    %cst_11 = arith.constant dense<0.000000e+00> : vector<2x32xf32>
    %16 = tpu.matmul %13, %15, %cst_11 {dimension_numbers = #tpu.dot_dimension_numbers<[1], [0], [0], [1], [0, 0, 1, 1], [], []>} : vector<2x32xf32>, vector<32x32xf32>, vector<2x32xf32> -> vector<2x32xf32>
    %17 = vector.extract_strided_slice %0 {offsets = [1, 0], sizes = [1, 32], strides = [1, 1]} : vector<8x32xf32> to vector<1x32xf32>
    %18 = vector.broadcast %17 : vector<1x32xf32> to vector<2x32xf32>
    %19 = arith.addf %16, %18 : vector<2x32xf32>
    %cst_12 = arith.constant dense<0.000000e+00> : vector<2xf32>
    %20 = vector.multi_reduction <add>, %19, %cst_12 [1] : vector<2x32xf32> to vector<2xf32>
    %21 = vector.shape_cast %20 : vector<2xf32> to vector<2x1xf32>
    %cst_13 = arith.constant 3.200000e+01 : f32
    %22 = vector.broadcast %cst_13 : f32 to vector<2x1xf32>
    %23 = arith.divf %21, %22 : vector<2x1xf32>
    %24 = vector.broadcast %23 : vector<2x1xf32> to vector<2x32xf32>
    %25 = arith.subf %19, %24 : vector<2x32xf32>
    %26 = arith.mulf %25, %25 : vector<2x32xf32>
    %cst_14 = arith.constant dense<0.000000e+00> : vector<2xf32>
    %27 = vector.multi_reduction <add>, %26, %cst_14 [1] : vector<2x32xf32> to vector<2xf32>
    %28 = vector.shape_cast %27 : vector<2xf32> to vector<2x1xf32>
    %cst_15 = arith.constant 3.200000e+01 : f32
    %29 = vector.broadcast %cst_15 : f32 to vector<2x1xf32>
    %30 = arith.divf %28, %29 : vector<2x1xf32>
    %cst_16 = arith.constant 9.99999974E-6 : f32
    %31 = vector.broadcast %cst_16 : f32 to vector<2x1xf32>
    %32 = arith.addf %30, %31 : vector<2x1xf32>
    %33 = math.rsqrt %32 : vector<2x1xf32>
    %34 = vector.broadcast %33 : vector<2x1xf32> to vector<2x32xf32>
    %35 = arith.mulf %25, %34 : vector<2x32xf32>
    %36 = vector.extract_strided_slice %0 {offsets = [2, 0], sizes = [1, 32], strides = [1, 1]} : vector<8x32xf32> to vector<1x32xf32>
    %37 = vector.broadcast %36 : vector<1x32xf32> to vector<2x32xf32>
    %38 = arith.mulf %35, %37 : vector<2x32xf32>
    %39 = vector.extract_strided_slice %0 {offsets = [3, 0], sizes = [1, 32], strides = [1, 1]} : vector<8x32xf32> to vector<1x32xf32>
    %40 = vector.broadcast %39 : vector<1x32xf32> to vector<2x32xf32>
    %41 = arith.addf %38, %40 : vector<2x32xf32>
    %42 = math.tanh %41 : vector<2x32xf32>
    %c2 = arith.constant 2 : index
    %c0_17 = arith.constant 0 : index
    %c0_18 = arith.constant 0 : index
    %43 = vector.load %arg2[%c2, %c0_17, %c0_18] : memref<4x32x32xf32, #tpu.memory_space<vmem>>, vector<1x32x32xf32>
    %44 = vector.shape_cast %43 : vector<1x32x32xf32> to vector<32x32xf32>
    %cst_19 = arith.constant dense<0.000000e+00> : vector<2x32xf32>
    %45 = tpu.matmul %42, %44, %cst_19 {dimension_numbers = #tpu.dot_dimension_numbers<[1], [0], [0], [1], [0, 0, 1, 1], [], []>} : vector<2x32xf32>, vector<32x32xf32>, vector<2x32xf32> -> vector<2x32xf32>
    %46 = vector.extract_strided_slice %0 {offsets = [4, 0], sizes = [1, 32], strides = [1, 1]} : vector<8x32xf32> to vector<1x32xf32>
    %47 = vector.broadcast %46 : vector<1x32xf32> to vector<2x32xf32>
    %48 = arith.addf %45, %47 : vector<2x32xf32>
    %cst_20 = arith.constant dense<0.000000e+00> : vector<2xf32>
    %49 = vector.multi_reduction <add>, %48, %cst_20 [1] : vector<2x32xf32> to vector<2xf32>
    %50 = vector.shape_cast %49 : vector<2xf32> to vector<2x1xf32>
    %cst_21 = arith.constant 3.200000e+01 : f32
    %51 = vector.broadcast %cst_21 : f32 to vector<2x1xf32>
    %52 = arith.divf %50, %51 : vector<2x1xf32>
    %53 = vector.broadcast %52 : vector<2x1xf32> to vector<2x32xf32>
    %54 = arith.subf %48, %53 : vector<2x32xf32>
    %55 = arith.mulf %54, %54 : vector<2x32xf32>
    %cst_22 = arith.constant dense<0.000000e+00> : vector<2xf32>
    %56 = vector.multi_reduction <add>, %55, %cst_22 [1] : vector<2x32xf32> to vector<2xf32>
    %57 = vector.shape_cast %56 : vector<2xf32> to vector<2x1xf32>
    %cst_23 = arith.constant 3.200000e+01 : f32
    %58 = vector.broadcast %cst_23 : f32 to vector<2x1xf32>
    %59 = arith.divf %57, %58 : vector<2x1xf32>
    %cst_24 = arith.constant 9.99999974E-6 : f32
    %60 = vector.broadcast %cst_24 : f32 to vector<2x1xf32>
    %61 = arith.addf %59, %60 : vector<2x1xf32>
    %62 = math.rsqrt %61 : vector<2x1xf32>
    %63 = vector.broadcast %62 : vector<2x1xf32> to vector<2x32xf32>
    %64 = arith.mulf %54, %63 : vector<2x32xf32>
    %65 = vector.extract_strided_slice %0 {offsets = [5, 0], sizes = [1, 32], strides = [1, 1]} : vector<8x32xf32> to vector<1x32xf32>
    %66 = vector.broadcast %65 : vector<1x32xf32> to vector<2x32xf32>
    %67 = arith.mulf %64, %66 : vector<2x32xf32>
    %68 = vector.extract_strided_slice %0 {offsets = [6, 0], sizes = [1, 32], strides = [1, 1]} : vector<8x32xf32> to vector<1x32xf32>
    %69 = vector.broadcast %68 : vector<1x32xf32> to vector<2x32xf32>
    %70 = arith.addf %67, %69 : vector<2x32xf32>
    %71 = math.tanh %70 : vector<2x32xf32>
    %c3 = arith.constant 3 : index
    %c0_25 = arith.constant 0 : index
    %c0_26 = arith.constant 0 : index
    %72 = vector.load %arg2[%c3, %c0_25, %c0_26] : memref<4x32x32xf32, #tpu.memory_space<vmem>>, vector<1x32x32xf32>
    %73 = vector.shape_cast %72 : vector<1x32x32xf32> to vector<32x32xf32>
    %cst_27 = arith.constant dense<0.000000e+00> : vector<2x32xf32>
    %74 = tpu.matmul %71, %73, %cst_27 {dimension_numbers = #tpu.dot_dimension_numbers<[1], [0], [0], [1], [0, 0, 1, 1], [], []>} : vector<2x32xf32>, vector<32x32xf32>, vector<2x32xf32> -> vector<2x32xf32>
    %75 = vector.extract_strided_slice %0 {offsets = [7, 0], sizes = [1, 32], strides = [1, 1]} : vector<8x32xf32> to vector<1x32xf32>
    %76 = vector.broadcast %75 : vector<1x32xf32> to vector<2x32xf32>
    %77 = arith.addf %74, %76 : vector<2x32xf32>
    %c0_28 = arith.constant 0 : index
    %c0_29 = arith.constant 0 : index
    %78 = vector.load %arg4[%c0_28, %c0_29] : memref<2x32xf32, #tpu.memory_space<vmem>>, vector<2x32xf32>
    tpu.vector_store %arg4[%c0_28, %c0_29], %77 {strides = array<i32>} : memref<2x32xf32, #tpu.memory_space<vmem>>, vector<2x32xf32>,
    return
  }
}

</mosaic_0001>

<llo_original>
// kernel: tpu_custom_call.1
$region0: #{tpu_custom_call.1}
  #allocation0 [shape = 'u32[]', space=smem, size = 0x4, offset = 0x4, fixed_abs, tag = 'smem constant byte address 0x4 - core index']
  #allocation1 [shape = 'u32[144,128]{1,0:T(1,128)}', space=vmem, size = 0x12000, scoped, tag = 'internal scratch']
  %s0 = inlined_call_operand.hbm [shape: f32[2,8], index: 0, kind: input, shape index: {}]
  %s1 = inlined_call_operand.vmem [shape: f32[2,4], index: 1, kind: input, shape index: {}]
  %s2 = inlined_call_operand.hbm [shape: f32[4,32,32], index: 2, kind: input, shape index: {}]
  %s3 = inlined_call_operand.vmem [shape: f32[8,32], index: 3, kind: input, shape index: {}]
  %s4 = inlined_call_operand.hbm [shape: f32[2,32], index: 4, kind: output, shape index: {}]
  %s5 = sld [smem:[#allocation0]]
  $region34: #{tpu_custom_call.1} parent=0
    _
  %s7 = ssub.s32 1, %s5
  %s8 = scalar_select 0, %s7, %s5
  $region1: #{tpu_custom_call.1} parent=0
    #allocation2 [shape = 'u8[1024]{0}', space=vmem, size = 0x400, scoped, tag = 'input window, operand 0, single buffered']
    #allocation3 [shape = 's32[1]{0}', space=sflag, size = 0x4, scoped, tag = 'scoped memory for tpu_custom_call.1']
    #allocation4 [shape = 's32[1]{0}', space=sflag, size = 0x4, scoped, tag = 'scoped memory for tpu_custom_call.1']
    #allocation5 [shape = 'u8[65536]{0}', space=vmem, size = 0x10000, scoped, tag = 'input window, operand 2, single buffered']
    #allocation6 [shape = 's32[1]{0}', space=sflag, size = 0x4, scoped, tag = 'scoped memory for tpu_custom_call.1']
    #allocation7 [shape = 'u8[1024]{0}', space=vmem, size = 0x400, scoped, tag = 'output window, operand 0, single buffered']
    %9 = vsyncpa [#allocation3], 0
    %10 = vsyncpa [#allocation6], 0
    %11 = vsyncpa [#allocation4], 0
    // Predicated region
    $region2: #{tpu_custom_call.1} parent=1 // pred_check
      _
    $region3: #{tpu_custom_call.1} parent=1 // pred_check_branch
      %13 = sbr.rel (0) target = $region5
    $region4: #{tpu_custom_call.1} parent=1 // pred_region
      %s15 = ssub.s32 32, 32
      %16 = vsyncadd [#allocation3], %s15
      %s18 = sshll.u32 [#allocation2], 4
      %s19 = int_to_ptr.vmem [resolvable:$true] %s18
      %21 = dma.hbm_to_vmem [thread:$0]  %s0, 32, %s19, [#allocation3]
    $region5: #{tpu_custom_call.1} parent=1 // pred_fallthru
      _
    // Predicated region
    $region6: #{tpu_custom_call.1} parent=1 // pred_check
      _
    $region7: #{tpu_custom_call.1} parent=1 // pred_check_branch
      %23 = sbr.rel (0) target = $region9
    $region8: #{tpu_custom_call.1} parent=1 // pred_region
      _
    $region9: #{tpu_custom_call.1} parent=1 // pred_fallthru
      _
    // Predicated region
    $region10: #{tpu_custom_call.1} parent=1 // pred_check
      _
    $region11: #{tpu_custom_call.1} parent=1 // pred_check_branch
      %25 = sbr.rel (0) target = $region13
    $region12: #{tpu_custom_call.1} parent=1 // pred_region
      %s27 = ssub.s32 2048, 2048
      %28 = vsyncadd [#allocation6], %s27
      %s29 = sshll.u32 [#allocation5], 4
      %s30 = int_to_ptr.vmem [resolvable:$true] %s29
      %35 = dma.hbm_to_vmem [thread:$0]  %s2, 2048, %s30, [#allocation6], 128, 128, 8
    $region13: #{tpu_custom_call.1} parent=1 // pred_fallthru
      _
    // Predicated region
    $region14: #{tpu_custom_call.1} parent=1 // pred_check
      _
    $region15: #{tpu_custom_call.1} parent=1 // pred_check_branch
      %37 = sbr.rel (0) target = $region17
    $region16: #{tpu_custom_call.1} parent=1 // pred_region
      _
    $region17: #{tpu_custom_call.1} parent=1 // pred_fallthru
      _
    // Predicated region
    $region18: #{tpu_custom_call.1} parent=1 // pred_check
      _
    $region19: #{tpu_custom_call.1} parent=1 // pred_check_branch
      %39 = sbr.rel (0) target = $region21
    $region20: #{tpu_custom_call.1} parent=1 // pred_region
      %40 = dma.done [#allocation3], 32
    $region21: #{tpu_custom_call.1} parent=1 // pred_fallthru
      _
    // Predicated region
    $region22: #{tpu_custom_call.1} parent=1 // pred_check
      _
    $region23: #{tpu_custom_call.1} parent=1 // pred_check_branch
      %42 = sbr.rel (0) target = $region25
    $region24: #{tpu_custom_call.1} parent=1 // pred_region
      %43 = dma.done [#allocation6], 2048
    $region25: #{tpu_custom_call.1} parent=1 // pred_fallthru
      _
    %v44 = vld [vmem:[%s3] sm:$0xff]
    %v45 = vld [vmem:[#allocation5] sm:$0xff]
    %v46 = vld [vmem:[#allocation5 + $0x8] sm:$0xff]
    %v47 = vld [vmem:[#allocation2] sm:$0x3]
    %v48 = vld [vmem:[%s1] sm:$0x3]
    %vm49 = vcmask 31744
    %v51 = vsel %vm49, %v48, 0
    %vm53 = vcmask 1043456
    %v55 = vsel %vm53, %v46, 0
    %57 = vmatprep.subr.mxu0 0.0
    %58 = vmatpush1.msra.mxu0 %v55
    %59 = vmatprep.subr.mxu0 0.0
    %60 = vmatpush1.msra.mxu0 0.0
    %61 = vmatprep.subr.mxu0 0.0
    %62 = vmatpush1.msra.mxu0 0.0
    %63 = vmatprep.subr.mxu0 0.0
    %64 = vmatpush1.msra.mxu0 0.0
    %65 = vmatprep.subr.mxu0 0.0
    %66 = vmatpush1.msra.mxu0 0.0
    %67 = vmatprep.subr.mxu0 0.0
    %68 = vmatpush1.msra.mxu0 0.0
    %69 = vmatprep.subr.mxu0 0.0
    %70 = vmatpush1.msra.mxu0 0.0
    %71 = vmatprep.subr.mxu0 0.0
    %72 = vmatpush1.msra.mxu0 0.0
    %73 = vmatprep.subr.mxu0 0.0
    %74 = vmatpush1.msra.mxu0 0.0
    %75 = vmatprep.subr.mxu0 0.0
    %76 = vmatpush1.msra.mxu0 0.0
    %77 = vmatprep.subr.mxu0 0.0
    %78 = vmatpush1.msra.mxu0 0.0
    %79 = vmatprep.subr.mxu0 0.0
    %80 = vmatpush1.msra.mxu0 0.0
    %81 = vmatprep.subr.mxu0 0.0
    %82 = vmatpush1.msra.mxu0 0.0
    %83 = vmatprep.subr.mxu0 0.0
    %84 = vmatpush1.msra.mxu0 0.0
    %85 = vmatprep.subr.mxu0 0.0
    %86 = vmatpush1.msra.mxu0 0.0
    %87 = vmatprep.subr.mxu0 0.0
    %88 = vmatpush1.msra.mxu0 0.0
    %89 = vmatprep.subr.mxu0 0.0
    %90 = vmatpush1.msra.mxu0 0.0
    %91 = vmatprep.subr.mxu0 0.0
    %92 = vmatpush1.msra.mxu0 0.0
    %93 = vmatprep.subr.mxu0 0.0
    %94 = vmatpush1.msra.mxu0 0.0
    %95 = vmatprep.subr.mxu0 0.0
    %96 = vmatpush1.msra.mxu0 0.0
    %97 = vmatprep.subr.mxu0 0.0
    %98 = vmatpush1.msra.mxu0 0.0
    %99 = vmatprep.subr.mxu0 0.0
    %100 = vmatpush1.msra.mxu0 0.0
    %101 = vmatprep.subr.mxu0 0.0
    %102 = vmatpush1.msra.mxu0 0.0
    %103 = vmatprep.subr.mxu0 0.0
    %104 = vmatpush1.msra.mxu0 0.0
    %105 = vmatprep.subr.mxu0 0.0
    %106 = vmatpush1.msra.mxu0 0.0
    %107 = vmatprep.subr.mxu0 0.0
    %108 = vmatpush1.msra.mxu0 0.0
    %109 = vmatprep.subr.mxu0 0.0
    %110 = vmatpush1.msra.mxu0 0.0
    %111 = vmatprep.subr.mxu0 0.0
    %112 = vmatpush1.msra.mxu0 0.0
    %113 = vmatprep.subr.mxu0 0.0
    %114 = vmatpush1.msra.mxu0 0.0
    %115 = vmatprep.subr.mxu0 0.0
    %116 = vmatpush1.msra.mxu0 0.0
    %117 = vmatprep.subr.mxu0 0.0
    %118 = vmatpush1.msra.mxu0 0.0
    %119 = vmatprep.subr.mxu0 0.0
    %120 = vmatpush1.msra.mxu0 0.0
    %121 = vmatprep.mubr.f32.mxu0 0.0
    %122 = vmatmul.mubr.f32.gmra.mrb[0].mxu0 %v51
    %v123 = vpop.f32.mrb[0].mxu0
    %v124 = vadd.f32 0.0, %v123
    %v125 = vpop.f32.mrb[0].mxu0
    %126 = vdwg.mxu0
    %vm127 = vcmask 64512
    %v129 = vsel %vm127, %v47, 0
    %131 = vmatprep.subr.mxu0 0.0
    %132 = vmatpush1.msra.mxu0 %v45
    %133 = vmatprep.subr.mxu0 0.0
    %134 = vmatpush1.msra.mxu0 0.0
    %135 = vmatprep.subr.mxu0 0.0
    %136 = vmatpush1.msra.mxu0 0.0
    %137 = vmatprep.subr.mxu0 0.0
    %138 = vmatpush1.msra.mxu0 0.0
    %139 = vmatprep.subr.mxu0 0.0
    %140 = vmatpush1.msra.mxu0 0.0
    %141 = vmatprep.subr.mxu0 0.0
    %142 = vmatpush1.msra.mxu0 0.0
    %143 = vmatprep.subr.mxu0 0.0
    %144 = vmatpush1.msra.mxu0 0.0
    %145 = vmatprep.subr.mxu0 0.0
    %146 = vmatpush1.msra.mxu0 0.0
    %147 = vmatprep.subr.mxu0 0.0
    %148 = vmatpush1.msra.mxu0 0.0
    %149 = vmatprep.subr.mxu0 0.0
    %150 = vmatpush1.msra.mxu0 0.0
    %151 = vmatprep.subr.mxu0 0.0
    %152 = vmatpush1.msra.mxu0 0.0
    %153 = vmatprep.subr.mxu0 0.0
    %154 = vmatpush1.msra.mxu0 0.0
    %155 = vmatprep.subr.mxu0 0.0
    %156 = vmatpush1.msra.mxu0 0.0
    %157 = vmatprep.subr.mxu0 0.0
    %158 = vmatpush1.msra.mxu0 0.0
    %159 = vmatprep.subr.mxu0 0.0
    %160 = vmatpush1.msra.mxu0 0.0
    %161 = vmatprep.subr.mxu0 0.0
    %162 = vmatpush1.msra.mxu0 0.0
    %163 = vmatprep.subr.mxu0 0.0
    %164 = vmatpush1.msra.mxu0 0.0
    %165 = vmatprep.subr.mxu0 0.0
    %166 = vmatpush1.msra.mxu0 0.0
    %167 = vmatprep.subr.mxu0 0.0
    %168 = vmatpush1.msra.mxu0 0.0
    %169 = vmatprep.subr.mxu0 0.0
    %170 = vmatpush1.msra.mxu0 0.0
    %171 = vmatprep.subr.mxu0 0.0
    %172 = vmatpush1.msra.mxu0 0.0
    %173 = vmatprep.subr.mxu0 0.0
    %174 = vmatpush1.msra.mxu0 0.0
    %175 = vmatprep.subr.mxu0 0.0
    %176 = vmatpush1.msra.mxu0 0.0
    %177 = vmatprep.subr.mxu0 0.0
    %178 = vmatpush1.msra.mxu0 0.0
    %179 = vmatprep.subr.mxu0 0.0
    %180 = vmatpush1.msra.mxu0 0.0
    %181 = vmatprep.subr.mxu0 0.0
    %182 = vmatpush1.msra.mxu0 0.0
    %183 = vmatprep.subr.mxu0 0.0
    %184 = vmatpush1.msra.mxu0 0.0
    %185 = vmatprep.subr.mxu0 0.0
    %186 = vmatpush1.msra.mxu0 0.0
    %187 = vmatprep.subr.mxu0 0.0
    %188 = vmatpush1.msra.mxu0 0.0
    %189 = vmatprep.subr.mxu0 0.0
    %190 = vmatpush1.msra.mxu0 0.0
    %191 = vmatprep.subr.mxu0 0.0
    %192 = vmatpush1.msra.mxu0 0.0
    %193 = vmatprep.subr.mxu0 0.0
    %194 = vmatpush1.msra.mxu0 0.0
    %195 = vmatprep.mubr.f32.mxu0 0.0
    %196 = vmatmul.mubr.f32.gmra.mrb[0].mxu0 %v129
    %v197 = vpop.f32.mrb[0].mxu0
    %v198 = vadd.f32 %v124, %v197
    %v199 = vpop.f32.mrb[0].mxu0
    %200 = vdwg.mxu0
    %v201 = vlaneseq
    %v202 = vshrl.u32 %v201, 7
    %v203 = vsub.s32 0, %v202
    %v204 = vrot.slane %v44, %v203
    %v205 = vadd.f32 %v198, %v204
    %v206 = vtanh.pop %v205
    %s207 = scalar_lea.vmem [#allocation5], 32
    %v208 = vld [vmem:[%s207] sm:$0xff]
    %v209 = vld [vmem:[%s207 + $0x8] sm:$0xff]
    %v210 = vld [vmem:[%s207 + $0x10] sm:$0xff]
    %v211 = vld [vmem:[%s207 + $0x18] sm:$0xff]
    %v212 = vlaneseq
    %v213 = vshrl.u32 %v212, 7
    %v214 = vsub.s32 1, %v213
    %v215 = vrot.slane %v44, %v214
    %vm216 = vcmask 261120
    %v218 = vsel %vm216, %v206, 0
    %220 = vmatprep.subr.mxu0 0.0
    %221 = vmatpush1.msra.mxu0 %v208
    %222 = vmatprep.subr.mxu0 0.0
    %223 = vmatpush1.msra.mxu0 %v209
    %224 = vmatprep.subr.mxu0 0.0
    %225 = vmatpush1.msra.mxu0 %v210
    %226 = vmatprep.subr.mxu0 0.0
    %227 = vmatpush1.msra.mxu0 %v211
    %228 = vmatprep.subr.mxu0 0.0
    %229 = vmatpush1.msra.mxu0 0.0
    %230 = vmatprep.subr.mxu0 0.0
    %231 = vmatpush1.msra.mxu0 0.0
    %232 = vmatprep.subr.mxu0 0.0
    %233 = vmatpush1.msra.mxu0 0.0
    %234 = vmatprep.subr.mxu0 0.0
    %235 = vmatpush1.msra.mxu0 0.0
    %236 = vmatprep.subr.mxu0 0.0
    %237 = vmatpush1.msra.mxu0 0.0
    %238 = vmatprep.subr.mxu0 0.0
    %239 = vmatpush1.msra.mxu0 0.0
    %240 = vmatprep.subr.mxu0 0.0
    %241 = vmatpush1.msra.mxu0 0.0
    %242 = vmatprep.subr.mxu0 0.0
    %243 = vmatpush1.msra.mxu0 0.0
    %244 = vmatprep.subr.mxu0 0.0
    %245 = vmatpush1.msra.mxu0 0.0
    %246 = vmatprep.subr.mxu0 0.0
    %247 = vmatpush1.msra.mxu0 0.0
    %248 = vmatprep.subr.mxu0 0.0
    %249 = vmatpush1.msra.mxu0 0.0
    %250 = vmatprep.subr.mxu0 0.0
    %251 = vmatpush1.msra.mxu0 0.0
    %252 = vmatprep.subr.mxu0 0.0
    %253 = vmatpush1.msra.mxu0 0.0
    %254 = vmatprep.subr.mxu0 0.0
    %255 = vmatpush1.msra.mxu0 0.0
    %256 = vmatprep.subr.mxu0 0.0
    %257 = vmatpush1.msra.mxu0 0.0
    %258 = vmatprep.subr.mxu0 0.0
    %259 = vmatpush1.msra.mxu0 0.0
    %260 = vmatprep.subr.mxu0 0.0
    %261 = vmatpush1.msra.mxu0 0.0
    %262 = vmatprep.subr.mxu0 0.0
    %263 = vmatpush1.msra.mxu0 0.0
    %264 = vmatprep.subr.mxu0 0.0
    %265 = vmatpush1.msra.mxu0 0.0
    %266 = vmatprep.subr.mxu0 0.0
    %267 = vmatpush1.msra.mxu0 0.0
    %268 = vmatprep.subr.mxu0 0.0
    %269 = vmatpush1.msra.mxu0 0.0
    %270 = vmatprep.subr.mxu0 0.0
    %271 = vmatpush1.msra.mxu0 0.0
    %272 = vmatprep.subr.mxu0 0.0
    %273 = vmatpush1.msra.mxu0 0.0
    %274 = vmatprep.subr.mxu0 0.0
    %275 = vmatpush1.msra.mxu0 0.0
    %276 = vmatprep.subr.mxu0 0.0
    %277 = vmatpush1.msra.mxu0 0.0
    %278 = vmatprep.subr.mxu0 0.0
    %279 = vmatpush1.msra.mxu0 0.0
    %280 = vmatprep.subr.mxu0 0.0
    %281 = vmatpush1.msra.mxu0 0.0
    %282 = vmatprep.subr.mxu0 0.0
    %283 = vmatpush1.msra.mxu0 0.0
    %284 = vmatprep.mubr.f32.mxu0 0.0
    %285 = vmatmul.mubr.f32.gmra.mrb[0].mxu0 %v218
    %v286 = vpop.f32.mrb[0].mxu0
    %v287 = vadd.f32 %v215, %v286
    %v288 = vpop.f32.mrb[0].mxu0
    %289 = vdwg.mxu0
    %vm290 = vcmask 254976
    %v291 = vsel %vm290, %v287, 0.0
    %292 = vadd.xlane.f32.xlu0 %v291
    %v293 = vpop.xlane.xlu0 %292
    %v294 = vrcp.pop 32.0
    %v295 = vmul.f32 %v293, %v294
    %v296 = vsub.f32 %v287, %v295
    %v297 = vmul.f32 %v296, %v296
    %v298 = vsel %vm290, %v297, 0.0
    %299 = vadd.xlane.f32.xlu0 %v298
    %v300 = vpop.xlane.xlu0 %299
    %v301 = vmul.f32 %v300, %v294
    %v302 = vadd.f32 %v301, 1e-05
    %v303 = vrsqrt.pop %v302
    %v304 = vmul.f32 %v296, %v303
    %v305 = vlaneseq
    %v306 = vshrl.u32 %v305, 7
    %v307 = vsub.s32 2, %v306
    %v308 = vrot.slane %v44, %v307
    %v309 = vmul.f32 %v304, %v308
    %v310 = vlaneseq
    %v311 = vshrl.u32 %v310, 7
    %v312 = vsub.s32 3, %v311
    %v313 = vrot.slane %v44, %v312
    %v314 = vadd.f32 %v309, %v313
    %v315 = vtanh.pop %v314
    %s316 = scalar_lea.vmem [#allocation5], 64
    %v317 = vld [vmem:[%s316] sm:$0xff]
    %v318 = vld [vmem:[%s316 + $0x8] sm:$0xff]
    %v319 = vld [vmem:[%s316 + $0x10] sm:$0xff]
    %v320 = vld [vmem:[%s316 + $0x18] sm:$0xff]
    %v321 = vlaneseq
    %v322 = vshrl.u32 %v321, 7
    %v323 = vsub.s32 4, %v322
    %v324 = vrot.slane %v44, %v323
    %v326 = vsel %vm216, %v315, 0
    %328 = vmatprep.subr.mxu0 0.0
    %329 = vmatpush1.msra.mxu0 %v317
    %330 = vmatprep.subr.mxu0 0.0
    %331 = vmatpush1.msra.mxu0 %v318
    %332 = vmatprep.subr.mxu0 0.0
    %333 = vmatpush1.msra.mxu0 %v319
    %334 = vmatprep.subr.mxu0 0.0
    %335 = vmatpush1.msra.mxu0 %v320
    %336 = vmatprep.subr.mxu0 0.0
    %337 = vmatpush1.msra.mxu0 0.0
    %338 = vmatprep.subr.mxu0 0.0
    %339 = vmatpush1.msra.mxu0 0.0
    %340 = vmatprep.subr.mxu0 0.0
    %341 = vmatpush1.msra.mxu0 0.0
    %342 = vmatprep.subr.mxu0 0.0
    %343 = vmatpush1.msra.mxu0 0.0
    %344 = vmatprep.subr.mxu0 0.0
    %345 = vmatpush1.msra.mxu0 0.0
    %346 = vmatprep.subr.mxu0 0.0
    %347 = vmatpush1.msra.mxu0 0.0
    %348 = vmatprep.subr.mxu0 0.0
    %349 = vmatpush1.msra.mxu0 0.0
    %350 = vmatprep.subr.mxu0 0.0
    %351 = vmatpush1.msra.mxu0 0.0
    %352 = vmatprep.subr.mxu0 0.0
    %353 = vmatpush1.msra.mxu0 0.0
    %354 = vmatprep.subr.mxu0 0.0
    %355 = vmatpush1.msra.mxu0 0.0
    %356 = vmatprep.subr.mxu0 0.0
    %357 = vmatpush1.msra.mxu0 0.0
    %358 = vmatprep.subr.mxu0 0.0
    %359 = vmatpush1.msra.mxu0 0.0
    %360 = vmatprep.subr.mxu0 0.0
    %361 = vmatpush1.msra.mxu0 0.0
    %362 = vmatprep.subr.mxu0 0.0
    %363 = vmatpush1.msra.mxu0 0.0
    %364 = vmatprep.subr.mxu0 0.0
    %365 = vmatpush1.msra.mxu0 0.0
    %366 = vmatprep.subr.mxu0 0.0
    %367 = vmatpush1.msra.mxu0 0.0
    %368 = vmatprep.subr.mxu0 0.0
    %369 = vmatpush1.msra.mxu0 0.0
    %370 = vmatprep.subr.mxu0 0.0
    %371 = vmatpush1.msra.mxu0 0.0
    %372 = vmatprep.subr.mxu0 0.0
    %373 = vmatpush1.msra.mxu0 0.0
    %374 = vmatprep.subr.mxu0 0.0
    %375 = vmatpush1.msra.mxu0 0.0
    %376 = vmatprep.subr.mxu0 0.0
    %377 = vmatpush1.msra.mxu0 0.0
    %378 = vmatprep.subr.mxu0 0.0
    %379 = vmatpush1.msra.mxu0 0.0
    %380 = vmatprep.subr.mxu0 0.0
    %381 = vmatpush1.msra.mxu0 0.0
    %382 = vmatprep.subr.mxu0 0.0
    %383 = vmatpush1.msra.mxu0 0.0
    %384 = vmatprep.subr.mxu0 0.0
    %385 = vmatpush1.msra.mxu0 0.0
    %386 = vmatprep.subr.mxu0 0.0
    %387 = vmatpush1.msra.mxu0 0.0
    %388 = vmatprep.subr.mxu0 0.0
    %389 = vmatpush1.msra.mxu0 0.0
    %390 = vmatprep.subr.mxu0 0.0
    %391 = vmatpush1.msra.mxu0 0.0
    %392 = vmatprep.mubr.f32.mxu0 0.0
    %393 = vmatmul.mubr.f32.gmra.mrb[0].mxu0 %v326
    %v394 = vpop.f32.mrb[0].mxu0
    %v395 = vadd.f32 %v324, %v394
    %v396 = vpop.f32.mrb[0].mxu0
    %397 = vdwg.mxu0
    %v398 = vsel %vm290, %v395, 0.0
    %399 = vadd.xlane.f32.xlu0 %v398
    %v400 = vpop.xlane.xlu0 %399
    %v401 = vmul.f32 %v400, %v294
    %v402 = vsub.f32 %v395, %v401
    %v403 = vmul.f32 %v402, %v402
    %v404 = vsel %vm290, %v403, 0.0
    %405 = vadd.xlane.f32.xlu0 %v404
    %v406 = vpop.xlane.xlu0 %405
    %v407 = vmul.f32 %v406, %v294
    %v408 = vadd.f32 %v407, 1e-05
    %v409 = vrsqrt.pop %v408
    %v410 = vmul.f32 %v402, %v409
    %v411 = vlaneseq
    %v412 = vshrl.u32 %v411, 7
    %v413 = vsub.s32 5, %v412
    %v414 = vrot.slane %v44, %v413
    %v415 = vmul.f32 %v410, %v414
    %v416 = vlaneseq
    %v417 = vshrl.u32 %v416, 7
    %v418 = vsub.s32 6, %v417
    %v419 = vrot.slane %v44, %v418
    %v420 = vadd.f32 %v415, %v419
    %v421 = vtanh.pop %v420
    %s422 = scalar_lea.vmem [#allocation5], 96
    %v423 = vld [vmem:[%s422] sm:$0xff]
    %v424 = vld [vmem:[%s422 + $0x8] sm:$0xff]
    %v425 = vld [vmem:[%s422 + $0x10] sm:$0xff]
    %v426 = vld [vmem:[%s422 + $0x18] sm:$0xff]
    %v427 = vlaneseq
    %v428 = vshrl.u32 %v427, 7
    %v429 = vsub.s32 7, %v428
    %v430 = vrot.slane %v44, %v429
    %v432 = vsel %vm216, %v421, 0
    %434 = vmatprep.subr.mxu0 0.0
    %435 = vmatpush1.msra.mxu0 %v423
    %436 = vmatprep.subr.mxu0 0.0
    %437 = vmatpush1.msra.mxu0 %v424
    %438 = vmatprep.subr.mxu0 0.0
    %439 = vmatpush1.msra.mxu0 %v425
    %440 = vmatprep.subr.mxu0 0.0
    %441 = vmatpush1.msra.mxu0 %v426
    %442 = vmatprep.subr.mxu0 0.0
    %443 = vmatpush1.msra.mxu0 0.0
    %444 = vmatprep.subr.mxu0 0.0
    %445 = vmatpush1.msra.mxu0 0.0
    %446 = vmatprep.subr.mxu0 0.0
    %447 = vmatpush1.msra.mxu0 0.0
    %448 = vmatprep.subr.mxu0 0.0
    %449 = vmatpush1.msra.mxu0 0.0
    %450 = vmatprep.subr.mxu0 0.0
    %451 = vmatpush1.msra.mxu0 0.0
    %452 = vmatprep.subr.mxu0 0.0
    %453 = vmatpush1.msra.mxu0 0.0
    %454 = vmatprep.subr.mxu0 0.0
    %455 = vmatpush1.msra.mxu0 0.0
    %456 = vmatprep.subr.mxu0 0.0
    %457 = vmatpush1.msra.mxu0 0.0
    %458 = vmatprep.subr.mxu0 0.0
    %459 = vmatpush1.msra.mxu0 0.0
    %460 = vmatprep.subr.mxu0 0.0
    %461 = vmatpush1.msra.mxu0 0.0
    %462 = vmatprep.subr.mxu0 0.0
    %463 = vmatpush1.msra.mxu0 0.0
    %464 = vmatprep.subr.mxu0 0.0
    %465 = vmatpush1.msra.mxu0 0.0
    %466 = vmatprep.subr.mxu0 0.0
    %467 = vmatpush1.msra.mxu0 0.0
    %468 = vmatprep.subr.mxu0 0.0
    %469 = vmatpush1.msra.mxu0 0.0
    %470 = vmatprep.subr.mxu0 0.0
    %471 = vmatpush1.msra.mxu0 0.0
    %472 = vmatprep.subr.mxu0 0.0
    %473 = vmatpush1.msra.mxu0 0.0
    %474 = vmatprep.subr.mxu0 0.0
    %475 = vmatpush1.msra.mxu0 0.0
    %476 = vmatprep.subr.mxu0 0.0
    %477 = vmatpush1.msra.mxu0 0.0
    %478 = vmatprep.subr.mxu0 0.0
    %479 = vmatpush1.msra.mxu0 0.0
    %480 = vmatprep.subr.mxu0 0.0
    %481 = vmatpush1.msra.mxu0 0.0
    %482 = vmatprep.subr.mxu0 0.0
    %483 = vmatpush1.msra.mxu0 0.0
    %484 = vmatprep.subr.mxu0 0.0
    %485 = vmatpush1.msra.mxu0 0.0
    %486 = vmatprep.subr.mxu0 0.0
    %487 = vmatpush1.msra.mxu0 0.0
    %488 = vmatprep.subr.mxu0 0.0
    %489 = vmatpush1.msra.mxu0 0.0
    %490 = vmatprep.subr.mxu0 0.0
    %491 = vmatpush1.msra.mxu0 0.0
    %492 = vmatprep.subr.mxu0 0.0
    %493 = vmatpush1.msra.mxu0 0.0
    %494 = vmatprep.subr.mxu0 0.0
    %495 = vmatpush1.msra.mxu0 0.0
    %496 = vmatprep.subr.mxu0 0.0
    %497 = vmatpush1.msra.mxu0 0.0
    %498 = vmatprep.mubr.f32.mxu0 0.0
    %499 = vmatmul.mubr.f32.gmra.mrb[0].mxu0 %v432
    %v500 = vpop.f32.mrb[0].mxu0
    %v501 = vadd.f32 %v430, %v500
    %v502 = vpop.f32.mrb[0].mxu0
    %503 = vdwg.mxu0
    %504 = vst.msk [vmem:[#allocation7] sm:$0x3] %vm290, %v501
    // Predicated region
    $region26: #{tpu_custom_call.1} parent=1 // pred_check
      _
    $region27: #{tpu_custom_call.1} parent=1 // pred_check_branch
      %506 = sbr.rel (0) target = $region29
    $region28: #{tpu_custom_call.1} parent=1 // pred_region
      %s508 = ssub.s32 32, 32
      %509 = vsyncadd [#allocation4], %s508
      %s511 = sshll.u32 [#allocation7], 4
      %s512 = int_to_ptr.vmem [resolvable:$true] %s511
      %514 = dma.vmem_to_hbm [thread:$0]  %s512, 32, %s4, [#allocation4]
    $region29: #{tpu_custom_call.1} parent=1 // pred_fallthru
      _
    // Predicated region
    $region30: #{tpu_custom_call.1} parent=1 // pred_check
      _
    $region31: #{tpu_custom_call.1} parent=1 // pred_check_branch
      %516 = sbr.rel (0) target = $region33
    $region32: #{tpu_custom_call.1} parent=1 // pred_region
      %517 = dma.done [#allocation4], 32
    $region33: #{tpu_custom_call.1} parent=1 // pred_fallthru
      _
    %518 = vsyncpa [#allocation3], 1
    %519 = vsyncpa [#allocation6], 1
    %520 = vsyncpa [#allocation4], 1

</llo_original>
